<compile_context>
chip_gen: v7x
topology: tpu7x:2x2x1
jax: 0.10.0
libtpu: 0.0.40
codegen_flags: <defaults>
</compile_context>

<pallas_src>
import jax
import jax.numpy as jnp
from jax.experimental import pallas as pl
from jax.experimental.pallas import tpu as pltpu

IN_FEATURES = 28 * 28   # 784
HIDDEN = 256
OUT_FEATURES = 10
OUT_PAD = 128           # lane-dense output width (>= OUT_FEATURES)
TB_MAX = 1024           # batch tile cap: multiple of 256, safe for v7x VMEM


def _round_up(x, m):
    return (x + m - 1) // m * m


def _mlp_kernel(x_ref, w1_ref, b1_ref, w2_ref, b2_ref, out_ref):
    # (TB, 784) bf16 @ (784, 256) bf16 -> f32 on the MXU.
    h = jnp.dot(x_ref[...], w1_ref[...], preferred_element_type=jnp.float32)
    h = jnp.maximum(h + b1_ref[...], 0.0)          # bias + ReLU in f32 (VPU)
    # (TB, 256) bf16 @ (256, 128) bf16 -> f32 on the MXU.
    o = jnp.dot(h.astype(jnp.bfloat16), w2_ref[...],
                preferred_element_type=jnp.float32)
    out_ref[...] = o + b2_ref[...]                 # lane-dense (TB, 128) store


def simplenet_forward(x_nchw, w1, b1, w2, b2, *, tb_max=TB_MAX):
    """Forward pass of SimpleNet.

    x_nchw : (N, 1, 28, 28) float32 (anything flattening to 784 features)
    w1     : (784, 256)  (transpose of torch fc[0].weight)
    b1     : (256,) or (1, 256)
    w2     : (256, 10)   (transpose of torch fc[2].weight)
    b2     : (10,)  or (1, 10)
    returns: (N, 10) float32
    """
    n = x_nchw.shape[0]
    x2d = x_nchw.reshape(n, -1)                    # nn.Flatten equivalent
    assert x2d.shape[1] == IN_FEATURES
    x2d = x2d.astype(jnp.bfloat16)                 # halve streamed HBM bytes

    # Batch tile: multiple of 16 (bf16 sublane packing); pad ragged batches.
    tb = min(tb_max, _round_up(n, 16))
    n_pad = _round_up(n, tb)
    if n_pad != n:
        x2d = jnp.pad(x2d, ((0, n_pad - n), (0, 0)))

    # Weights: bf16 operands, f32 biases; lane-pad the output dim to 128.
    w1b = w1.astype(jnp.bfloat16)
    b1f = b1.reshape(1, HIDDEN).astype(jnp.float32)
    w2b = jnp.zeros((HIDDEN, OUT_PAD), jnp.bfloat16)
    w2b = w2b.at[:, :OUT_FEATURES].set(w2.astype(jnp.bfloat16))
    b2f = jnp.zeros((1, OUT_PAD), jnp.float32)
    b2f = b2f.at[:, :OUT_FEATURES].set(b2.reshape(1, OUT_FEATURES).astype(jnp.float32))

    grid = (pl.cdiv(n_pad, tb),)
    out_pad = pl.pallas_call(
        _mlp_kernel,
        out_shape=jax.ShapeDtypeStruct((n_pad, OUT_PAD), jnp.float32),
        grid=grid,
        in_specs=[
            pl.BlockSpec((tb, IN_FEATURES), lambda i: (i, 0)),   # x: streamed
            pl.BlockSpec((IN_FEATURES, HIDDEN), lambda i: (0, 0)),  # w1: resident
            pl.BlockSpec((1, HIDDEN), lambda i: (0, 0)),            # b1: resident
            pl.BlockSpec((HIDDEN, OUT_PAD), lambda i: (0, 0)),      # w2: resident
            pl.BlockSpec((1, OUT_PAD), lambda i: (0, 0)),           # b2: resident
        ],
        out_specs=pl.BlockSpec((tb, OUT_PAD), lambda i: (i, 0)),
        compiler_params=pltpu.CompilerParams(
            dimension_semantics=("parallel",)),
    )(x2d, w1b, b1f, w2b, b2f)

    return out_pad[:n, :OUT_FEATURES]


def init_params(key):
    """Deterministic parameter init (Kaiming-uniform-ish, like torch Linear)."""
    k1, k2, k3, k4 = jax.random.split(key, 4)
    bound1 = 1.0 / (IN_FEATURES ** 0.5)
    bound2 = 1.0 / (HIDDEN ** 0.5)
    w1 = jax.random.uniform(k1, (IN_FEATURES, HIDDEN), jnp.float32,
                            minval=-bound1, maxval=bound1)
    b1 = jax.random.uniform(k2, (1, HIDDEN), jnp.float32,
                            minval=-bound1, maxval=bound1)
    w2 = jax.random.uniform(k3, (HIDDEN, OUT_FEATURES), jnp.float32,
                            minval=-bound2, maxval=bound2)
    b2 = jax.random.uniform(k4, (1, OUT_FEATURES), jnp.float32,
                            minval=-bound2, maxval=bound2)
    return w1, b1, w2, b2


if __name__ == "__main__":
    key = jax.random.PRNGKey(0)
    kx, kp = jax.random.split(key)

    batch = 8
    x = jax.random.normal(kx, (batch, 1, 28, 28), jnp.float32)  # NCHW like MNIST
    w1, b1, w2, b2 = init_params(kp)

    out = simplenet_forward(x, w1, b1, w2, b2)
    out = jax.block_until_ready(out)
    assert out.shape == (batch, OUT_FEATURES)

    # Reference mirroring the kernel's numerics (bf16 operands, f32 accum).
    x2d = x.reshape(batch, -1)
    xb = x2d.astype(jnp.bfloat16).astype(jnp.float32)
    w1f = w1.astype(jnp.bfloat16).astype(jnp.float32)
    w2f = w2.astype(jnp.bfloat16).astype(jnp.float32)
    h = jnp.maximum(xb @ w1f + b1, 0.0)
    hb = h.astype(jnp.bfloat16).astype(jnp.float32)
    ref_bf16 = hb @ w2f + b2
    assert jnp.allclose(out, ref_bf16, atol=5e-3, rtol=1e-2)

    # Loose check against the pure-f32 math of the original module.
    ref_f32 = jnp.maximum(x2d @ w1 + b1, 0.0) @ w2 + b2
    assert jnp.allclose(out, ref_f32, atol=5e-2, rtol=5e-2)

    print("KERNEL_OK")
</pallas_src>

<mosaic_0001>
module attributes {stable_mosaic.version = 11 : i64} {
  func.func @_mlp_kernel(%arg0: i32, %arg1: memref<16x784xbf16, #tpu.memory_space<vmem>>, %arg2: memref<784x256xbf16, #tpu.memory_space<vmem>>, %arg3: memref<1x256xf32, #tpu.memory_space<vmem>>, %arg4: memref<256x128xbf16, #tpu.memory_space<vmem>>, %arg5: memref<1x128xf32, #tpu.memory_space<vmem>>, %arg6: memref<16x128xf32, #tpu.memory_space<vmem>>) attributes {dimension_semantics = [#tpu.dimension_semantics<parallel>], iteration_bounds = array<i64: 1>, scalar_prefetch = 0 : i64, scratch_operands = 0 : i64, tpu.core_type = #tpu.core_type<tc>, window_params = [{transform_indices = @transform_0, window_bounds = array<i64: 16, 784>}, {pipeline_mode = #tpu.pipeline_mode<synchronous>, transform_indices = @transform_1, window_bounds = array<i64: 784, 256>}, {pipeline_mode = #tpu.pipeline_mode<synchronous>, transform_indices = @transform_2, window_bounds = array<i64: 1, 256>}, {pipeline_mode = #tpu.pipeline_mode<synchronous>, transform_indices = @transform_3, window_bounds = array<i64: 256, 128>}, {pipeline_mode = #tpu.pipeline_mode<synchronous>, transform_indices = @transform_4, window_bounds = array<i64: 1, 128>}, {transform_indices = @transform_5, window_bounds = array<i64: 16, 128>}]} {
    %c0 = arith.constant 0 : index
    %c0_0 = arith.constant 0 : index
    %0 = vector.load %arg1[%c0, %c0_0] : memref<16x784xbf16, #tpu.memory_space<vmem>>, vector<16x784xbf16>
    %c0_1 = arith.constant 0 : index
    %c0_2 = arith.constant 0 : index
    %1 = vector.load %arg2[%c0_1, %c0_2] : memref<784x256xbf16, #tpu.memory_space<vmem>>, vector<784x256xbf16>
    %cst = arith.constant dense<0.000000e+00> : vector<16x256xf32>
    %2 = tpu.matmul %0, %1, %cst {dimension_numbers = #tpu.dot_dimension_numbers<[1], [0], [0], [1], [0, 0, 1, 1], [], []>} : vector<16x784xbf16>, vector<784x256xbf16>, vector<16x256xf32> -> vector<16x256xf32>
    %c0_3 = arith.constant 0 : index
    %c0_4 = arith.constant 0 : index
    %3 = vector.load %arg3[%c0_3, %c0_4] : memref<1x256xf32, #tpu.memory_space<vmem>>, vector<1x256xf32>
    %4 = vector.broadcast %3 : vector<1x256xf32> to vector<16x256xf32>
    %5 = arith.addf %2, %4 : vector<16x256xf32>
    %cst_5 = arith.constant 0.000000e+00 : f32
    %6 = vector.broadcast %cst_5 : f32 to vector<16x256xf32>
    %7 = arith.maximumf %5, %6 : vector<16x256xf32>
    %8 = arith.truncf %7 : vector<16x256xf32> to vector<16x256xbf16>
    %c0_6 = arith.constant 0 : index
    %c0_7 = arith.constant 0 : index
    %9 = vector.load %arg4[%c0_6, %c0_7] : memref<256x128xbf16, #tpu.memory_space<vmem>>, vector<256x128xbf16>
    %cst_8 = arith.constant dense<0.000000e+00> : vector<16x128xf32>
    %10 = tpu.matmul %8, %9, %cst_8 {dimension_numbers = #tpu.dot_dimension_numbers<[1], [0], [0], [1], [0, 0, 1, 1], [], []>} : vector<16x256xbf16>, vector<256x128xbf16>, vector<16x128xf32> -> vector<16x128xf32>
    %c0_9 = arith.constant 0 : index
    %c0_10 = arith.constant 0 : index
    %11 = vector.load %arg5[%c0_9, %c0_10] : memref<1x128xf32, #tpu.memory_space<vmem>>, vector<1x128xf32>
    %12 = vector.broadcast %11 : vector<1x128xf32> to vector<16x128xf32>
    %13 = arith.addf %10, %12 : vector<16x128xf32>
    %c0_11 = arith.constant 0 : index
    %c0_12 = arith.constant 0 : index
    %14 = vector.load %arg6[%c0_11, %c0_12] : memref<16x128xf32, #tpu.memory_space<vmem>>, vector<16x128xf32>
    tpu.vector_store %arg6[%c0_11, %c0_12], %13 {strides = array<i32>} : memref<16x128xf32, #tpu.memory_space<vmem>>, vector<16x128xf32>,
    return
  }
  func.func @transform_0(%arg0: i32) -> (i32, i32) {
    %c0_i32 = arith.constant 0 : i32
    %c0_i32_0 = arith.constant 0 : i32
    return %arg0, %c0_i32 : i32, i32
  }
  func.func @transform_1(%arg0: i32) -> (i32, i32) {
    %c0_i32 = arith.constant 0 : i32
    %c0_i32_0 = arith.constant 0 : i32
    %c0_i32_1 = arith.constant 0 : i32
    return %c0_i32, %c0_i32_0 : i32, i32
  }
  func.func @transform_2(%arg0: i32) -> (i32, i32) {
    %c0_i32 = arith.constant 0 : i32
    %c0_i32_0 = arith.constant 0 : i32
    %c0_i32_1 = arith.constant 0 : i32
    return %c0_i32, %c0_i32_0 : i32, i32
  }
  func.func @transform_3(%arg0: i32) -> (i32, i32) {
    %c0_i32 = arith.constant 0 : i32
    %c0_i32_0 = arith.constant 0 : i32
    %c0_i32_1 = arith.constant 0 : i32
    return %c0_i32, %c0_i32_0 : i32, i32
  }
  func.func @transform_4(%arg0: i32) -> (i32, i32) {
    %c0_i32 = arith.constant 0 : i32
    %c0_i32_0 = arith.constant 0 : i32
    %c0_i32_1 = arith.constant 0 : i32
    return %c0_i32, %c0_i32_0 : i32, i32
  }
  func.func @transform_5(%arg0: i32) -> (i32, i32) {
    %c0_i32 = arith.constant 0 : i32
    %c0_i32_0 = arith.constant 0 : i32
    return %arg0, %c0_i32 : i32, i32
  }
}

</mosaic_0001>

<llo_original>
// kernel: tpu_custom_call.1
$region0: #{tpu_custom_call.1}
  #allocation0 [shape = 'u32[]', space=smem, size = 0x4, offset = 0x4, fixed_abs, tag = 'smem constant byte address 0x4 - core index']
  #allocation1 [shape = 'u32[144,128]{1,0:T(1,128)}', space=vmem, size = 0x12000, scoped, tag = 'internal scratch']
  %s0 = inlined_call_operand.hbm [shape: bf16[16,784], index: 0, kind: input, shape index: {}]
  %s1 = inlined_call_operand.hbm [shape: bf16[784,256], index: 1, kind: input, shape index: {}]
  %s2 = inlined_call_operand.vmem [shape: f32[1,256], index: 2, kind: input, shape index: {}]
  %s3 = inlined_call_operand.hbm [shape: bf16[256,128], index: 3, kind: input, shape index: {}]
  %s4 = inlined_call_operand.vmem [shape: f32[1,128], index: 4, kind: input, shape index: {}]
  %s5 = inlined_call_operand.hbm [shape: f32[16,128], index: 5, kind: output, shape index: {}]
  %s6 = sld [smem:[#allocation0]]
  $region42: #{tpu_custom_call.1} parent=0
    _
  %s8 = ssub.s32 1, %s6
  %s9 = scalar_select 0, %s8, %s6
  $region1: #{tpu_custom_call.1} parent=0
    #allocation2 [shape = 'u8[28672]{0}', space=vmem, size = 0x7000, scoped, tag = 'input window, operand 0, single buffered']
    #allocation3 [shape = 's32[1]{0}', space=sflag, size = 0x4, scoped, tag = 'scoped memory for tpu_custom_call.1']
    #allocation4 [shape = 's32[1]{0}', space=sflag, size = 0x4, scoped, tag = 'scoped memory for tpu_custom_call.1']
    #allocation5 [shape = 'u8[401408]{0}', space=vmem, size = 0x62000, scoped, tag = 'input window, operand 1, single buffered']
    #allocation6 [shape = 's32[1]{0}', space=sflag, size = 0x4, scoped, tag = 'scoped memory for tpu_custom_call.1']
    #allocation7 [shape = 'u8[65536]{0}', space=vmem, size = 0x10000, scoped, tag = 'input window, operand 3, single buffered']
    #allocation8 [shape = 'u8[8192]{0}', space=vmem, size = 0x2000, scoped, tag = 'output window, operand 0, single buffered']
    %10 = vsyncpa [#allocation3], 0
    %11 = vsyncpa [#allocation6], 0
    %12 = vsyncpa [#allocation4], 0
    // Predicated region
    $region2: #{tpu_custom_call.1} parent=1 // pred_check
      _
    $region3: #{tpu_custom_call.1} parent=1 // pred_check_branch
      %14 = sbr.rel (0) target = $region5
    $region4: #{tpu_custom_call.1} parent=1 // pred_region
      %s16 = ssub.s32 896, 896
      %17 = vsyncadd [#allocation3], %s16
      %s18 = sshll.u32 [#allocation2], 4
      %s19 = int_to_ptr.vmem [resolvable:$true] %s18
      %24 = dma.hbm_to_vmem [thread:$0]  %s0, 896, %s19, [#allocation3], 448, 448, 28
    $region5: #{tpu_custom_call.1} parent=1 // pred_fallthru
      _
    // Predicated region
    $region6: #{tpu_custom_call.1} parent=1 // pred_check
      _
    $region7: #{tpu_custom_call.1} parent=1 // pred_check_branch
      %26 = sbr.rel (0) target = $region9
    $region8: #{tpu_custom_call.1} parent=1 // pred_region
      %s28 = ssub.s32 12544, 12544
      %29 = vsyncadd [#allocation6], %s28
      %s30 = sshll.u32 [#allocation5], 4
      %s31 = int_to_ptr.vmem [resolvable:$true] %s30
      %36 = dma.hbm_to_vmem [thread:$0]  %s1, 12544, %s31, [#allocation6], 128, 128, 8
    $region9: #{tpu_custom_call.1} parent=1 // pred_fallthru
      _
    // Predicated region
    $region10: #{tpu_custom_call.1} parent=1 // pred_check
      _
    $region11: #{tpu_custom_call.1} parent=1 // pred_check_branch
      %38 = sbr.rel (0) target = $region13
    $region12: #{tpu_custom_call.1} parent=1 // pred_region
      _
    $region13: #{tpu_custom_call.1} parent=1 // pred_fallthru
      _
    // Predicated region
    $region14: #{tpu_custom_call.1} parent=1 // pred_check
      _
    $region15: #{tpu_custom_call.1} parent=1 // pred_check_branch
      %40 = sbr.rel (0) target = $region17
    $region16: #{tpu_custom_call.1} parent=1 // pred_region
      %s42 = ssub.s32 2048, 2048
      %43 = vsyncadd [#allocation6], %s42
      %s44 = sshll.u32 [#allocation7], 4
      %s45 = int_to_ptr.vmem [resolvable:$true] %s44
      %50 = dma.hbm_to_vmem [thread:$0]  %s3, 2048, %s45, [#allocation6], 64, 64, 4
    $region17: #{tpu_custom_call.1} parent=1 // pred_fallthru
      _
    // Predicated region
    $region18: #{tpu_custom_call.1} parent=1 // pred_check
      _
    $region19: #{tpu_custom_call.1} parent=1 // pred_check_branch
      %52 = sbr.rel (0) target = $region21
    $region20: #{tpu_custom_call.1} parent=1 // pred_region
      _
    $region21: #{tpu_custom_call.1} parent=1 // pred_fallthru
      _
    // Predicated region
    $region22: #{tpu_custom_call.1} parent=1 // pred_check
      _
    $region23: #{tpu_custom_call.1} parent=1 // pred_check_branch
      %54 = sbr.rel (0) target = $region25
    $region24: #{tpu_custom_call.1} parent=1 // pred_region
      %55 = dma.done [#allocation3], 896
    $region25: #{tpu_custom_call.1} parent=1 // pred_fallthru
      _
    // Predicated region
    $region26: #{tpu_custom_call.1} parent=1 // pred_check
      _
    $region27: #{tpu_custom_call.1} parent=1 // pred_check_branch
      %57 = sbr.rel (0) target = $region29
    $region28: #{tpu_custom_call.1} parent=1 // pred_region
      %58 = dma.done [#allocation6], 12544
    $region29: #{tpu_custom_call.1} parent=1 // pred_fallthru
      _
    // Predicated region
    $region30: #{tpu_custom_call.1} parent=1 // pred_check
      _
    $region31: #{tpu_custom_call.1} parent=1 // pred_check_branch
      %60 = sbr.rel (0) target = $region33
    $region32: #{tpu_custom_call.1} parent=1 // pred_region
      %61 = dma.done [#allocation6], 2048
    $region33: #{tpu_custom_call.1} parent=1 // pred_fallthru
      _
    %v63 = vld [vmem:[#allocation2] sm:$0xff]
    %v64 = vld [vmem:[#allocation2 + $0x8] sm:$0xff]
    %v65 = vld [vmem:[#allocation2 + $0x10] sm:$0xff]
    %v66 = vld [vmem:[#allocation2 + $0x18] sm:$0xf]
    %v67 = vld [vmem:[#allocation2 + $0x1c] sm:$0xff]
    %v68 = vld [vmem:[#allocation2 + $0x24] sm:$0xff]
    %v69 = vld [vmem:[#allocation2 + $0x2c] sm:$0xff]
    %v70 = vld [vmem:[#allocation2 + $0x34] sm:$0xf]
    %v71 = vld [vmem:[#allocation5] sm:$0xff]
    %v72 = vld [vmem:[#allocation5 + $0x8] sm:$0xff]
    %v73 = vld [vmem:[#allocation5 + $0x10] sm:$0xff]
    %v74 = vld [vmem:[#allocation5 + $0x18] sm:$0xff]
    %v75 = vld [vmem:[#allocation5 + $0x20] sm:$0xff]
    %v76 = vld [vmem:[#allocation5 + $0x28] sm:$0xff]
    %v77 = vld [vmem:[#allocation5 + $0x30] sm:$0xff]
    %v78 = vld [vmem:[#allocation5 + $0x38] sm:$0xff]
    %v79 = vld [vmem:[#allocation5 + $0x40] sm:$0xff]
    %v80 = vld [vmem:[#allocation5 + $0x48] sm:$0xff]
    %v81 = vld [vmem:[#allocation5 + $0x50] sm:$0xff]
    %v82 = vld [vmem:[#allocation5 + $0x58] sm:$0xff]
    %v83 = vld [vmem:[#allocation5 + $0x60] sm:$0xff]
    %v84 = vld [vmem:[#allocation5 + $0x68] sm:$0xff]
    %v85 = vld [vmem:[#allocation5 + $0x70] sm:$0xff]
    %v86 = vld [vmem:[#allocation5 + $0x78] sm:$0xff]
    %v87 = vld [vmem:[#allocation5 + $0x80] sm:$0xff]
    %v88 = vld [vmem:[#allocation5 + $0x88] sm:$0xff]
    %v89 = vld [vmem:[#allocation5 + $0x90] sm:$0xff]
    %v90 = vld [vmem:[#allocation5 + $0x98] sm:$0xff]
    %v91 = vld [vmem:[#allocation5 + $0xa0] sm:$0xff]
    %v92 = vld [vmem:[#allocation5 + $0xa8] sm:$0xff]
    %v93 = vld [vmem:[#allocation5 + $0xb0] sm:$0xff]
    %v94 = vld [vmem:[#allocation5 + $0xb8] sm:$0xff]
    %v95 = vld [vmem:[#allocation5 + $0xc0] sm:$0xff]
    %v96 = vld [vmem:[#allocation5 + $0xc8] sm:$0xff]
    %v97 = vld [vmem:[#allocation5 + $0xd0] sm:$0xff]
    %v98 = vld [vmem:[#allocation5 + $0xd8] sm:$0xff]
    %v99 = vld [vmem:[#allocation5 + $0xe0] sm:$0xff]
    %v100 = vld [vmem:[#allocation5 + $0xe8] sm:$0xff]
    %v101 = vld [vmem:[#allocation5 + $0xf0] sm:$0xff]
    %v102 = vld [vmem:[#allocation5 + $0xf8] sm:$0xff]
    %v103 = vld [vmem:[#allocation5 + $0x100] sm:$0xff]
    %v104 = vld [vmem:[#allocation5 + $0x108] sm:$0xff]
    %v105 = vld [vmem:[#allocation5 + $0x110] sm:$0xff]
    %v106 = vld [vmem:[#allocation5 + $0x118] sm:$0xff]
    %v107 = vld [vmem:[#allocation5 + $0x120] sm:$0xff]
    %v108 = vld [vmem:[#allocation5 + $0x128] sm:$0xff]
    %v109 = vld [vmem:[#allocation5 + $0x130] sm:$0xff]
    %v110 = vld [vmem:[#allocation5 + $0x138] sm:$0xff]
    %v111 = vld [vmem:[#allocation5 + $0x140] sm:$0xff]
    %v112 = vld [vmem:[#allocation5 + $0x148] sm:$0xff]
    %v113 = vld [vmem:[#allocation5 + $0x150] sm:$0xff]
    %v114 = vld [vmem:[#allocation5 + $0x158] sm:$0xff]
    %v115 = vld [vmem:[#allocation5 + $0x160] sm:$0xff]
    %v116 = vld [vmem:[#allocation5 + $0x168] sm:$0xff]
    %v117 = vld [vmem:[#allocation5 + $0x170] sm:$0xff]
    %v118 = vld [vmem:[#allocation5 + $0x178] sm:$0xff]
    %v119 = vld [vmem:[#allocation5 + $0x180] sm:$0xff]
    %v120 = vld [vmem:[#allocation5 + $0x188] sm:$0xff]
    %v121 = vld [vmem:[#allocation5 + $0x190] sm:$0xff]
    %v122 = vld [vmem:[#allocation5 + $0x198] sm:$0xff]
    %v123 = vld [vmem:[#allocation5 + $0x1a0] sm:$0xff]
    %v124 = vld [vmem:[#allocation5 + $0x1a8] sm:$0xff]
    %v125 = vld [vmem:[#allocation5 + $0x1b0] sm:$0xff]
    %v126 = vld [vmem:[#allocation5 + $0x1b8] sm:$0xff]
    %v127 = vld [vmem:[#allocation5 + $0x1c0] sm:$0xff]
    %v128 = vld [vmem:[#allocation5 + $0x1c8] sm:$0xff]
    %v129 = vld [vmem:[#allocation5 + $0x1d0] sm:$0xff]
    %v130 = vld [vmem:[#allocation5 + $0x1d8] sm:$0xff]
    %v131 = vld [vmem:[#allocation5 + $0x1e0] sm:$0xff]
    %v132 = vld [vmem:[#allocation5 + $0x1e8] sm:$0xff]
    %v133 = vld [vmem:[#allocation5 + $0x1f0] sm:$0xff]
    %v134 = vld [vmem:[#allocation5 + $0x1f8] sm:$0xff]
    %v135 = vld [vmem:[#allocation5 + $0x200] sm:$0xff]
    %v136 = vld [vmem:[#allocation5 + $0x208] sm:$0xff]
    %v137 = vld [vmem:[#allocation5 + $0x210] sm:$0xff]
    %v138 = vld [vmem:[#allocation5 + $0x218] sm:$0xff]
    %v139 = vld [vmem:[#allocation5 + $0x220] sm:$0xff]
    %v140 = vld [vmem:[#allocation5 + $0x228] sm:$0xff]
    %v141 = vld [vmem:[#allocation5 + $0x230] sm:$0xff]
    %v142 = vld [vmem:[#allocation5 + $0x238] sm:$0xff]
    %v143 = vld [vmem:[#allocation5 + $0x240] sm:$0xff]
    %v144 = vld [vmem:[#allocation5 + $0x248] sm:$0xff]
    %v145 = vld [vmem:[#allocation5 + $0x250] sm:$0xff]
    %v146 = vld [vmem:[#allocation5 + $0x258] sm:$0xff]
    %v147 = vld [vmem:[#allocation5 + $0x260] sm:$0xff]
    %v148 = vld [vmem:[#allocation5 + $0x268] sm:$0xff]
    %v149 = vld [vmem:[#allocation5 + $0x270] sm:$0xff]
    %v150 = vld [vmem:[#allocation5 + $0x278] sm:$0xff]
    %v151 = vld [vmem:[#allocation5 + $0x280] sm:$0xff]
    %v152 = vld [vmem:[#allocation5 + $0x288] sm:$0xff]
    %v153 = vld [vmem:[#allocation5 + $0x290] sm:$0xff]
    %v154 = vld [vmem:[#allocation5 + $0x298] sm:$0xff]
    %v155 = vld [vmem:[#allocation5 + $0x2a0] sm:$0xff]
    %v156 = vld [vmem:[#allocation5 + $0x2a8] sm:$0xff]
    %v157 = vld [vmem:[#allocation5 + $0x2b0] sm:$0xff]
    %v158 = vld [vmem:[#allocation5 + $0x2b8] sm:$0xff]
    %v159 = vld [vmem:[#allocation5 + $0x2c0] sm:$0xff]
    %v160 = vld [vmem:[#allocation5 + $0x2c8] sm:$0xff]
    %v161 = vld [vmem:[#allocation5 + $0x2d0] sm:$0xff]
    %v162 = vld [vmem:[#allocation5 + $0x2d8] sm:$0xff]
    %v163 = vld [vmem:[#allocation5 + $0x2e0] sm:$0xff]
    %v164 = vld [vmem:[#allocation5 + $0x2e8] sm:$0xff]
    %v165 = vld [vmem:[#allocation5 + $0x2f0] sm:$0xff]
    %v166 = vld [vmem:[#allocation5 + $0x2f8] sm:$0xff]
    %v167 = vld [vmem:[#allocation5 + $0x300] sm:$0xff]
    %v168 = vld [vmem:[#allocation5 + $0x308] sm:$0xff]
    %v169 = vld [vmem:[%s2] sm:$0x3]
    %v171 = vlaneseq
    %v172 = vshrl.u32 %v171, 7
    %v173 = vsub.s32 0, %v172
    %v174 = vrot.slane %v169, %v173
    %v175 = vlaneseq
    %v176 = vshrl.u32 %v175, 7
    %v177 = vsub.s32 1, %v176
    %v178 = vrot.slane %v169, %v177
    %v189 = vunpack.c.l.b16 %v63
    %v190 = vunpack.c.h.b16 %v63
    %v191 = vunpack.c.l.b16 %v64
    %v192 = vunpack.c.h.b16 %v64
    %v193 = vunpack.c.l.b16 %v65
    %v194 = vunpack.c.h.b16 %v65
    %v195 = vunpack.c.l.b16 %v66
    %v196 = vunpack.c.l.b16 %v67
    %v197 = vunpack.c.h.b16 %v67
    %v198 = vunpack.c.l.b16 %v68
    %v199 = vunpack.c.h.b16 %v68
    %v200 = vunpack.c.l.b16 %v69
    %v201 = vunpack.c.h.b16 %v69
    %v202 = vunpack.c.l.b16 %v70
    %v203 = vpack.c.b16 %v196, %v189
    %v204 = vpack.c.b16 %v197, %v190
    %v205 = vpack.c.b16 %v198, %v191
    %v206 = vpack.c.b16 %v199, %v192
    %v207 = vpack.c.b16 %v200, %v193
    %v208 = vpack.c.b16 %v201, %v194
    %v209 = vpack.c.b16 %v202, %v195
    %v314 = vunpack.c.l.b16 %v71
    %v315 = vunpack.c.h.b16 %v71
    %v316 = vunpack.c.l.b16 %v72
    %v317 = vunpack.c.h.b16 %v72
    %v318 = vunpack.c.l.b16 %v73
    %v319 = vunpack.c.h.b16 %v73
    %v320 = vunpack.c.l.b16 %v74
    %v321 = vunpack.c.h.b16 %v74
    %v322 = vunpack.c.l.b16 %v75
    %v323 = vunpack.c.h.b16 %v75
    %v324 = vunpack.c.l.b16 %v76
    %v325 = vunpack.c.h.b16 %v76
    %v326 = vunpack.c.l.b16 %v77
    %v327 = vunpack.c.h.b16 %v77
    %v328 = vunpack.c.l.b16 %v78
    %v329 = vunpack.c.h.b16 %v78
    %v330 = vunpack.c.l.b16 %v79
    %v331 = vunpack.c.h.b16 %v79
    %v332 = vunpack.c.l.b16 %v80
    %v333 = vunpack.c.h.b16 %v80
    %v334 = vunpack.c.l.b16 %v81
    %v335 = vunpack.c.h.b16 %v81
    %v336 = vunpack.c.l.b16 %v82
    %v337 = vunpack.c.h.b16 %v82
    %v338 = vunpack.c.l.b16 %v83
    %v339 = vunpack.c.h.b16 %v83
    %v340 = vunpack.c.l.b16 %v84
    %v341 = vunpack.c.h.b16 %v84
    %v342 = vunpack.c.l.b16 %v85
    %v343 = vunpack.c.h.b16 %v85
    %v344 = vunpack.c.l.b16 %v86
    %v345 = vunpack.c.h.b16 %v86
    %v346 = vunpack.c.l.b16 %v87
    %v347 = vunpack.c.h.b16 %v87
    %v348 = vunpack.c.l.b16 %v88
    %v349 = vunpack.c.h.b16 %v88
    %v350 = vunpack.c.l.b16 %v89
    %v351 = vunpack.c.h.b16 %v89
    %v352 = vunpack.c.l.b16 %v90
    %v353 = vunpack.c.h.b16 %v90
    %v354 = vunpack.c.l.b16 %v91
    %v355 = vunpack.c.h.b16 %v91
    %v356 = vunpack.c.l.b16 %v92
    %v357 = vunpack.c.h.b16 %v92
    %v358 = vunpack.c.l.b16 %v93
    %v359 = vunpack.c.h.b16 %v93
    %v360 = vunpack.c.l.b16 %v94
    %v361 = vunpack.c.h.b16 %v94
    %v362 = vunpack.c.l.b16 %v95
    %v363 = vunpack.c.h.b16 %v95
    %v364 = vunpack.c.l.b16 %v96
    %v365 = vunpack.c.h.b16 %v96
    %v366 = vunpack.c.l.b16 %v97
    %v367 = vunpack.c.h.b16 %v97
    %v368 = vunpack.c.l.b16 %v98
    %v369 = vunpack.c.h.b16 %v98
    %v370 = vunpack.c.l.b16 %v99
    %v371 = vunpack.c.h.b16 %v99
    %v372 = vunpack.c.l.b16 %v100
    %v373 = vunpack.c.h.b16 %v100
    %v374 = vunpack.c.l.b16 %v101
    %v375 = vunpack.c.h.b16 %v101
    %v376 = vunpack.c.l.b16 %v102
    %v377 = vunpack.c.h.b16 %v102
    %v378 = vunpack.c.l.b16 %v103
    %v379 = vunpack.c.h.b16 %v103
    %v380 = vunpack.c.l.b16 %v104
    %v381 = vunpack.c.h.b16 %v104
    %v382 = vunpack.c.l.b16 %v105
    %v383 = vunpack.c.h.b16 %v105
    %v384 = vunpack.c.l.b16 %v106
    %v385 = vunpack.c.h.b16 %v106
    %v386 = vunpack.c.l.b16 %v107
    %v387 = vunpack.c.h.b16 %v107
    %v388 = vunpack.c.l.b16 %v108
    %v389 = vunpack.c.h.b16 %v108
    %v390 = vunpack.c.l.b16 %v109
    %v391 = vunpack.c.h.b16 %v109
    %v392 = vunpack.c.l.b16 %v110
    %v393 = vunpack.c.h.b16 %v110
    %v394 = vunpack.c.l.b16 %v111
    %v395 = vunpack.c.h.b16 %v111
    %v396 = vunpack.c.l.b16 %v112
    %v397 = vunpack.c.h.b16 %v112
    %v398 = vunpack.c.l.b16 %v113
    %v399 = vunpack.c.h.b16 %v113
    %v400 = vunpack.c.l.b16 %v114
    %v401 = vunpack.c.h.b16 %v114
    %v402 = vunpack.c.l.b16 %v115
    %v403 = vunpack.c.h.b16 %v115
    %v404 = vunpack.c.l.b16 %v116
    %v405 = vunpack.c.h.b16 %v116
    %v406 = vunpack.c.l.b16 %v117
    %v407 = vunpack.c.h.b16 %v117
    %v408 = vunpack.c.l.b16 %v118
    %v409 = vunpack.c.h.b16 %v118
    %v410 = vunpack.c.l.b16 %v119
    %v411 = vunpack.c.h.b16 %v119
    %v412 = vunpack.c.l.b16 %v120
    %v413 = vunpack.c.h.b16 %v120
    %v414 = vunpack.c.l.b16 %v121
    %v415 = vunpack.c.h.b16 %v121
    %v416 = vunpack.c.l.b16 %v122
    %v417 = vunpack.c.h.b16 %v122
    %v418 = vunpack.c.l.b16 %v123
    %v419 = vunpack.c.h.b16 %v123
    %v420 = vunpack.c.l.b16 %v124
    %v421 = vunpack.c.h.b16 %v124
    %v422 = vunpack.c.l.b16 %v125
    %v423 = vunpack.c.h.b16 %v125
    %v424 = vunpack.c.l.b16 %v126
    %v425 = vunpack.c.h.b16 %v126
    %v426 = vunpack.c.l.b16 %v127
    %v427 = vunpack.c.h.b16 %v127
    %v428 = vunpack.c.l.b16 %v128
    %v429 = vunpack.c.h.b16 %v128
    %v430 = vunpack.c.l.b16 %v129
    %v431 = vunpack.c.h.b16 %v129
    %v432 = vunpack.c.l.b16 %v130
    %v433 = vunpack.c.h.b16 %v130
    %v434 = vunpack.c.l.b16 %v131
    %v435 = vunpack.c.h.b16 %v131
    %v436 = vunpack.c.l.b16 %v132
    %v437 = vunpack.c.h.b16 %v132
    %v438 = vunpack.c.l.b16 %v133
    %v439 = vunpack.c.h.b16 %v133
    %v440 = vunpack.c.l.b16 %v134
    %v441 = vunpack.c.h.b16 %v134
    %v442 = vunpack.c.l.b16 %v135
    %v443 = vunpack.c.h.b16 %v135
    %v444 = vunpack.c.l.b16 %v136
    %v445 = vunpack.c.h.b16 %v136
    %v446 = vunpack.c.l.b16 %v137
    %v447 = vunpack.c.h.b16 %v137
    %v448 = vunpack.c.l.b16 %v138
    %v449 = vunpack.c.h.b16 %v138
    %v450 = vunpack.c.l.b16 %v139
    %v451 = vunpack.c.h.b16 %v139
    %v452 = vunpack.c.l.b16 %v140
    %v453 = vunpack.c.h.b16 %v140
    %v454 = vunpack.c.l.b16 %v141
    %v455 = vunpack.c.h.b16 %v141
    %v456 = vunpack.c.l.b16 %v142
    %v457 = vunpack.c.h.b16 %v142
    %v458 = vunpack.c.l.b16 %v143
    %v459 = vunpack.c.h.b16 %v143
    %v460 = vunpack.c.l.b16 %v144
    %v461 = vunpack.c.h.b16 %v144
    %v462 = vunpack.c.l.b16 %v145
    %v463 = vunpack.c.h.b16 %v145
    %v464 = vunpack.c.l.b16 %v146
    %v465 = vunpack.c.h.b16 %v146
    %v466 = vunpack.c.l.b16 %v147
    %v467 = vunpack.c.h.b16 %v147
    %v468 = vunpack.c.l.b16 %v148
    %v469 = vunpack.c.h.b16 %v148
    %v470 = vunpack.c.l.b16 %v149
    %v471 = vunpack.c.h.b16 %v149
    %v472 = vunpack.c.l.b16 %v150
    %v473 = vunpack.c.h.b16 %v150
    %v474 = vunpack.c.l.b16 %v151
    %v475 = vunpack.c.h.b16 %v151
    %v476 = vunpack.c.l.b16 %v152
    %v477 = vunpack.c.h.b16 %v152
    %v478 = vunpack.c.l.b16 %v153
    %v479 = vunpack.c.h.b16 %v153
    %v480 = vunpack.c.l.b16 %v154
    %v481 = vunpack.c.h.b16 %v154
    %v482 = vunpack.c.l.b16 %v155
    %v483 = vunpack.c.h.b16 %v155
    %v484 = vunpack.c.l.b16 %v156
    %v485 = vunpack.c.h.b16 %v156
    %v486 = vunpack.c.l.b16 %v157
    %v487 = vunpack.c.h.b16 %v157
    %v488 = vunpack.c.l.b16 %v158
    %v489 = vunpack.c.h.b16 %v158
    %v490 = vunpack.c.l.b16 %v159
    %v491 = vunpack.c.h.b16 %v159
    %v492 = vunpack.c.l.b16 %v160
    %v493 = vunpack.c.h.b16 %v160
    %v494 = vunpack.c.l.b16 %v161
    %v495 = vunpack.c.h.b16 %v161
    %v496 = vunpack.c.l.b16 %v162
    %v497 = vunpack.c.h.b16 %v162
    %v498 = vunpack.c.l.b16 %v163
    %v499 = vunpack.c.h.b16 %v163
    %v500 = vunpack.c.l.b16 %v164
    %v501 = vunpack.c.h.b16 %v164
    %v502 = vunpack.c.l.b16 %v165
    %v503 = vunpack.c.h.b16 %v165
    %v504 = vunpack.c.l.b16 %v166
    %v505 = vunpack.c.h.b16 %v166
    %v506 = vunpack.c.l.b16 %v167
    %v507 = vunpack.c.h.b16 %v167
    %v508 = vunpack.c.l.b16 %v168
    %v509 = vunpack.c.h.b16 %v168
    %v510 = vpack.c.b16 %v316, %v314
    %v511 = vpack.c.b16 %v317, %v315
    %v512 = vpack.c.b16 %v320, %v318
    %v513 = vpack.c.b16 %v321, %v319
    %v514 = vpack.c.b16 %v324, %v322
    %v515 = vpack.c.b16 %v325, %v323
    %v516 = vpack.c.b16 %v328, %v326
    %v517 = vpack.c.b16 %v329, %v327
    %v518 = vpack.c.b16 %v332, %v330
    %v519 = vpack.c.b16 %v333, %v331
    %v520 = vpack.c.b16 %v336, %v334
    %v521 = vpack.c.b16 %v337, %v335
    %v522 = vpack.c.b16 %v340, %v338
    %v523 = vpack.c.b16 %v341, %v339
    %v524 = vpack.c.b16 %v344, %v342
    %v525 = vpack.c.b16 %v345, %v343
    %v526 = vpack.c.b16 %v348, %v346
    %v527 = vpack.c.b16 %v349, %v347
    %v528 = vpack.c.b16 %v352, %v350
    %v529 = vpack.c.b16 %v353, %v351
    %v530 = vpack.c.b16 %v356, %v354
    %v531 = vpack.c.b16 %v357, %v355
    %v532 = vpack.c.b16 %v360, %v358
    %v533 = vpack.c.b16 %v361, %v359
    %v534 = vpack.c.b16 %v364, %v362
    %v535 = vpack.c.b16 %v365, %v363
    %v536 = vpack.c.b16 %v368, %v366
    %v537 = vpack.c.b16 %v369, %v367
    %v538 = vpack.c.b16 %v372, %v370
    %v539 = vpack.c.b16 %v373, %v371
    %v540 = vpack.c.b16 %v376, %v374
    %v541 = vpack.c.b16 %v377, %v375
    %v542 = vpack.c.b16 %v380, %v378
    %v543 = vpack.c.b16 %v381, %v379
    %v544 = vpack.c.b16 %v384, %v382
    %v545 = vpack.c.b16 %v385, %v383
    %v546 = vpack.c.b16 %v388, %v386
    %v547 = vpack.c.b16 %v389, %v387
    %v548 = vpack.c.b16 %v392, %v390
    %v549 = vpack.c.b16 %v393, %v391
    %v550 = vpack.c.b16 %v396, %v394
    %v551 = vpack.c.b16 %v397, %v395
    %v552 = vpack.c.b16 %v400, %v398
    %v553 = vpack.c.b16 %v401, %v399
    %v554 = vpack.c.b16 %v404, %v402
    %v555 = vpack.c.b16 %v405, %v403
    %v556 = vpack.c.b16 %v408, %v406
    %v557 = vpack.c.b16 %v409, %v407
    %v558 = vpack.c.b16 %v412, %v410
    %v559 = vpack.c.b16 %v413, %v411
    %v560 = vpack.c.b16 %v416, %v414
    %v561 = vpack.c.b16 %v417, %v415
    %v562 = vpack.c.b16 %v420, %v418
    %v563 = vpack.c.b16 %v421, %v419
    %v564 = vpack.c.b16 %v424, %v422
    %v565 = vpack.c.b16 %v425, %v423
    %v566 = vpack.c.b16 %v428, %v426
    %v567 = vpack.c.b16 %v429, %v427
    %v568 = vpack.c.b16 %v432, %v430
    %v569 = vpack.c.b16 %v433, %v431
    %v570 = vpack.c.b16 %v436, %v434
    %v571 = vpack.c.b16 %v437, %v435
    %v572 = vpack.c.b16 %v440, %v438
    %v573 = vpack.c.b16 %v441, %v439
    %v574 = vpack.c.b16 %v444, %v442
    %v575 = vpack.c.b16 %v445, %v443
    %v576 = vpack.c.b16 %v448, %v446
    %v577 = vpack.c.b16 %v449, %v447
    %v578 = vpack.c.b16 %v452, %v450
    %v579 = vpack.c.b16 %v453, %v451
    %v580 = vpack.c.b16 %v456, %v454
    %v581 = vpack.c.b16 %v457, %v455
    %v582 = vpack.c.b16 %v460, %v458
    %v583 = vpack.c.b16 %v461, %v459
    %v584 = vpack.c.b16 %v464, %v462
    %v585 = vpack.c.b16 %v465, %v463
    %v586 = vpack.c.b16 %v468, %v466
    %v587 = vpack.c.b16 %v469, %v467
    %v588 = vpack.c.b16 %v472, %v470
    %v589 = vpack.c.b16 %v473, %v471
    %v590 = vpack.c.b16 %v476, %v474
    %v591 = vpack.c.b16 %v477, %v475
    %v592 = vpack.c.b16 %v480, %v478
    %v593 = vpack.c.b16 %v481, %v479
    %v594 = vpack.c.b16 %v484, %v482
    %v595 = vpack.c.b16 %v485, %v483
    %v596 = vpack.c.b16 %v488, %v486
    %v597 = vpack.c.b16 %v489, %v487
    %v598 = vpack.c.b16 %v492, %v490
    %v599 = vpack.c.b16 %v493, %v491
    %v600 = vpack.c.b16 %v496, %v494
    %v601 = vpack.c.b16 %v497, %v495
    %v602 = vpack.c.b16 %v500, %v498
    %v603 = vpack.c.b16 %v501, %v499
    %v604 = vpack.c.b16 %v504, %v502
    %v605 = vpack.c.b16 %v505, %v503
    %v606 = vpack.c.b16 %v508, %v506
    %v607 = vpack.c.b16 %v509, %v507
    %vm706 = vcmask 130048
    %v708 = vsel %vm706, %v209, 0
    %710 = vmatprep.subr.bf16.mxu0 %v511
    %711 = vmatpush1.bf16.msra.mxu0 %v510
    %712 = vmatprep.subr.bf16.mxu0 %v513
    %713 = vmatpush1.bf16.msra.mxu0 %v512
    %714 = vmatprep.subr.bf16.mxu0 %v515
    %715 = vmatpush1.bf16.msra.mxu0 %v514
    %716 = vmatprep.subr.bf16.mxu0 %v517
    %717 = vmatpush1.bf16.msra.mxu0 %v516
    %718 = vmatprep.subr.bf16.mxu0 %v519
    %719 = vmatpush1.bf16.msra.mxu0 %v518
    %720 = vmatprep.subr.bf16.mxu0 %v521
    %721 = vmatpush1.bf16.msra.mxu0 %v520
    %722 = vmatprep.subr.bf16.mxu0 %v523
    %723 = vmatpush1.bf16.msra.mxu0 %v522
    %724 = vmatprep.subr.bf16.mxu0 %v525
    %725 = vmatpush1.bf16.msra.mxu0 %v524
    %726 = vmatprep.subr.bf16.mxu0 %v527
    %727 = vmatpush1.bf16.msra.mxu0 %v526
    %728 = vmatprep.subr.bf16.mxu0 %v529
    %729 = vmatpush1.bf16.msra.mxu0 %v528
    %730 = vmatprep.subr.bf16.mxu0 %v531
    %731 = vmatpush1.bf16.msra.mxu0 %v530
    %732 = vmatprep.subr.bf16.mxu0 %v533
    %733 = vmatpush1.bf16.msra.mxu0 %v532
    %734 = vmatprep.subr.bf16.mxu0 %v535
    %735 = vmatpush1.bf16.msra.mxu0 %v534
    %736 = vmatprep.subr.bf16.mxu0 %v537
    %737 = vmatpush1.bf16.msra.mxu0 %v536
    %738 = vmatprep.subr.bf16.mxu0 %v539
    %739 = vmatpush1.bf16.msra.mxu0 %v538
    %740 = vmatprep.subr.bf16.mxu0 %v541
    %741 = vmatpush1.bf16.msra.mxu0 %v540
    %742 = vmatprep.mubr.bf16.mxu0 %v204
    %743 = vmatmul.mubr.bf16.gmra.mrb[0].mxu0 %v203
    %v744 = vpop.f32.mrb[0].mxu0
    %v745 = vadd.f32 %v174, %v744
    %v746 = vpop.f32.mrb[0].mxu0
    %v747 = vadd.f32 %v178, %v746
    %v748 = vpop.f32.mrb[0].mxu0
    %v749 = vadd.f32 %v174, %v748
    %v750 = vpop.f32.mrb[0].mxu0
    %v751 = vadd.f32 %v178, %v750
    %752 = vdwg.mxu0
    %753 = vmatprep.subr.bf16.mxu0 %v543
    %754 = vmatpush1.bf16.msra.mxu0 %v542
    %755 = vmatprep.subr.bf16.mxu0 %v545
    %756 = vmatpush1.bf16.msra.mxu0 %v544
    %757 = vmatprep.subr.bf16.mxu0 %v547
    %758 = vmatpush1.bf16.msra.mxu0 %v546
    %759 = vmatprep.subr.bf16.mxu0 %v549
    %760 = vmatpush1.bf16.msra.mxu0 %v548
    %761 = vmatprep.subr.bf16.mxu0 %v551
    %762 = vmatpush1.bf16.msra.mxu0 %v550
    %763 = vmatprep.subr.bf16.mxu0 %v553
    %764 = vmatpush1.bf16.msra.mxu0 %v552
    %765 = vmatprep.subr.bf16.mxu0 %v555
    %766 = vmatpush1.bf16.msra.mxu0 %v554
    %767 = vmatprep.subr.bf16.mxu0 %v557
    %768 = vmatpush1.bf16.msra.mxu0 %v556
    %769 = vmatprep.subr.bf16.mxu0 %v559
    %770 = vmatpush1.bf16.msra.mxu0 %v558
    %771 = vmatprep.subr.bf16.mxu0 %v561
    %772 = vmatpush1.bf16.msra.mxu0 %v560
    %773 = vmatprep.subr.bf16.mxu0 %v563
    %774 = vmatpush1.bf16.msra.mxu0 %v562
    %775 = vmatprep.subr.bf16.mxu0 %v565
    %776 = vmatpush1.bf16.msra.mxu0 %v564
    %777 = vmatprep.subr.bf16.mxu0 %v567
    %778 = vmatpush1.bf16.msra.mxu0 %v566
    %779 = vmatprep.subr.bf16.mxu0 %v569
    %780 = vmatpush1.bf16.msra.mxu0 %v568
    %781 = vmatprep.subr.bf16.mxu0 %v571
    %782 = vmatpush1.bf16.msra.mxu0 %v570
    %783 = vmatprep.subr.bf16.mxu0 %v573
    %784 = vmatpush1.bf16.msra.mxu0 %v572
    %785 = vmatprep.mubr.bf16.mxu0 %v206
    %786 = vmatmul.mubr.bf16.gmra.mrb[0].mxu0 %v205
    %v787 = vpop.f32.mrb[0].mxu0
    %v788 = vadd.f32 %v745, %v787
    %v789 = vpop.f32.mrb[0].mxu0
    %v790 = vadd.f32 %v747, %v789
    %v791 = vpop.f32.mrb[0].mxu0
    %v792 = vadd.f32 %v749, %v791
    %v793 = vpop.f32.mrb[0].mxu0
    %v794 = vadd.f32 %v751, %v793
    %795 = vdwg.mxu0
    %796 = vmatprep.subr.bf16.mxu0 %v575
    %797 = vmatpush1.bf16.msra.mxu0 %v574
    %798 = vmatprep.subr.bf16.mxu0 %v577
    %799 = vmatpush1.bf16.msra.mxu0 %v576
    %800 = vmatprep.subr.bf16.mxu0 %v579
    %801 = vmatpush1.bf16.msra.mxu0 %v578
    %802 = vmatprep.subr.bf16.mxu0 %v581
    %803 = vmatpush1.bf16.msra.mxu0 %v580
    %804 = vmatprep.subr.bf16.mxu0 %v583
    %805 = vmatpush1.bf16.msra.mxu0 %v582
    %806 = vmatprep.subr.bf16.mxu0 %v585
    %807 = vmatpush1.bf16.msra.mxu0 %v584
    %808 = vmatprep.subr.bf16.mxu0 %v587
    %809 = vmatpush1.bf16.msra.mxu0 %v586
    %810 = vmatprep.subr.bf16.mxu0 %v589
    %811 = vmatpush1.bf16.msra.mxu0 %v588
    %812 = vmatprep.subr.bf16.mxu0 %v591
    %813 = vmatpush1.bf16.msra.mxu0 %v590
    %814 = vmatprep.subr.bf16.mxu0 %v593
    %815 = vmatpush1.bf16.msra.mxu0 %v592
    %816 = vmatprep.subr.bf16.mxu0 %v595
    %817 = vmatpush1.bf16.msra.mxu0 %v594
    %818 = vmatprep.subr.bf16.mxu0 %v597
    %819 = vmatpush1.bf16.msra.mxu0 %v596
    %820 = vmatprep.subr.bf16.mxu0 %v599
    %821 = vmatpush1.bf16.msra.mxu0 %v598
    %822 = vmatprep.subr.bf16.mxu0 %v601
    %823 = vmatpush1.bf16.msra.mxu0 %v600
    %824 = vmatprep.subr.bf16.mxu0 %v603
    %825 = vmatpush1.bf16.msra.mxu0 %v602
    %826 = vmatprep.subr.bf16.mxu0 %v605
    %827 = vmatpush1.bf16.msra.mxu0 %v604
    %828 = vmatprep.mubr.bf16.mxu0 %v208
    %829 = vmatmul.mubr.bf16.gmra.mrb[0].mxu0 %v207
    %v830 = vpop.f32.mrb[0].mxu0
    %v831 = vadd.f32 %v788, %v830
    %v832 = vpop.f32.mrb[0].mxu0
    %v833 = vadd.f32 %v790, %v832
    %v834 = vpop.f32.mrb[0].mxu0
    %v835 = vadd.f32 %v792, %v834
    %v836 = vpop.f32.mrb[0].mxu0
    %v837 = vadd.f32 %v794, %v836
    %838 = vdwg.mxu0
    %839 = vmatprep.subr.bf16.mxu0 %v607
    %840 = vmatpush1.bf16.msra.mxu0 %v606
    %841 = vmatprep.subr.bf16.mxu0 0
    %842 = vmatpush1.bf16.msra.mxu0 0
    %843 = vmatprep.subr.bf16.mxu0 0
    %844 = vmatpush1.bf16.msra.mxu0 0
    %845 = vmatprep.subr.bf16.mxu0 0
    %846 = vmatpush1.bf16.msra.mxu0 0
    %847 = vmatprep.subr.bf16.mxu0 0
    %848 = vmatpush1.bf16.msra.mxu0 0
    %849 = vmatprep.subr.bf16.mxu0 0
    %850 = vmatpush1.bf16.msra.mxu0 0
    %851 = vmatprep.subr.bf16.mxu0 0
    %852 = vmatpush1.bf16.msra.mxu0 0
    %853 = vmatprep.subr.bf16.mxu0 0
    %854 = vmatpush1.bf16.msra.mxu0 0
    %855 = vmatprep.subr.bf16.mxu0 0
    %856 = vmatpush1.bf16.msra.mxu0 0
    %857 = vmatprep.subr.bf16.mxu0 0
    %858 = vmatpush1.bf16.msra.mxu0 0
    %859 = vmatprep.subr.bf16.mxu0 0
    %860 = vmatpush1.bf16.msra.mxu0 0
    %861 = vmatprep.subr.bf16.mxu0 0
    %862 = vmatpush1.bf16.msra.mxu0 0
    %863 = vmatprep.subr.bf16.mxu0 0
    %864 = vmatpush1.bf16.msra.mxu0 0
    %865 = vmatprep.subr.bf16.mxu0 0
    %866 = vmatpush1.bf16.msra.mxu0 0
    %867 = vmatprep.subr.bf16.mxu0 0
    %868 = vmatpush1.bf16.msra.mxu0 0
    %869 = vmatprep.subr.bf16.mxu0 0
    %870 = vmatpush1.bf16.msra.mxu0 0
    %871 = vmatprep.mubr.bf16.mxu0 0
    %872 = vmatmul.mubr.bf16.gmra.mrb[0].mxu0 %v708
    %v873 = vpop.f32.mrb[0].mxu0
    %v874 = vadd.f32 %v831, %v873
    %v875 = vpop.f32.mrb[0].mxu0
    %v876 = vadd.f32 %v833, %v875
    %v877 = vpop.f32.mrb[0].mxu0
    %v878 = vadd.f32 %v835, %v877
    %v879 = vpop.f32.mrb[0].mxu0
    %v880 = vadd.f32 %v837, %v879
    %881 = vdwg.mxu0
    %v882 = vmax.f32 %v874, 0.0
    %v883 = vmax.f32 %v876, 0.0
    %v884 = vmax.f32 %v878, 0.0
    %v885 = vmax.f32 %v880, 0.0
    %v886 = vpack.c.bf16 %v884, %v882
    %v887 = vpack.c.bf16 %v885, %v883
    %v888 = vld [vmem:[#allocation7] sm:$0xf]
    %v889 = vld [vmem:[#allocation7 + $0x4] sm:$0xf]
    %v890 = vld [vmem:[#allocation7 + $0x8] sm:$0xf]
    %v891 = vld [vmem:[#allocation7 + $0xc] sm:$0xf]
    %v892 = vld [vmem:[#allocation7 + $0x10] sm:$0xf]
    %v893 = vld [vmem:[#allocation7 + $0x14] sm:$0xf]
    %v894 = vld [vmem:[#allocation7 + $0x18] sm:$0xf]
    %v895 = vld [vmem:[#allocation7 + $0x1c] sm:$0xf]
    %v896 = vld [vmem:[#allocation7 + $0x20] sm:$0xf]
    %v897 = vld [vmem:[#allocation7 + $0x24] sm:$0xf]
    %v898 = vld [vmem:[#allocation7 + $0x28] sm:$0xf]
    %v899 = vld [vmem:[#allocation7 + $0x2c] sm:$0xf]
    %v900 = vld [vmem:[#allocation7 + $0x30] sm:$0xf]
    %v901 = vld [vmem:[#allocation7 + $0x34] sm:$0xf]
    %v902 = vld [vmem:[#allocation7 + $0x38] sm:$0xf]
    %v903 = vld [vmem:[#allocation7 + $0x3c] sm:$0xf]
    %v904 = vld [vmem:[#allocation7 + $0x40] sm:$0xf]
    %v905 = vld [vmem:[#allocation7 + $0x44] sm:$0xf]
    %v906 = vld [vmem:[#allocation7 + $0x48] sm:$0xf]
    %v907 = vld [vmem:[#allocation7 + $0x4c] sm:$0xf]
    %v908 = vld [vmem:[#allocation7 + $0x50] sm:$0xf]
    %v909 = vld [vmem:[#allocation7 + $0x54] sm:$0xf]
    %v910 = vld [vmem:[#allocation7 + $0x58] sm:$0xf]
    %v911 = vld [vmem:[#allocation7 + $0x5c] sm:$0xf]
    %v912 = vld [vmem:[#allocation7 + $0x60] sm:$0xf]
    %v913 = vld [vmem:[#allocation7 + $0x64] sm:$0xf]
    %v914 = vld [vmem:[#allocation7 + $0x68] sm:$0xf]
    %v915 = vld [vmem:[#allocation7 + $0x6c] sm:$0xf]
    %v916 = vld [vmem:[#allocation7 + $0x70] sm:$0xf]
    %v917 = vld [vmem:[#allocation7 + $0x74] sm:$0xf]
    %v918 = vld [vmem:[#allocation7 + $0x78] sm:$0xf]
    %v919 = vld [vmem:[#allocation7 + $0x7c] sm:$0xf]
    %v920 = vld [vmem:[%s4] sm:$0x1]
    %v922 = vlaneseq
    %v923 = vshrl.u32 %v922, 7
    %v924 = vsub.s32 0, %v923
    %v925 = vrot.slane %v920, %v924
    %v959 = vunpack.c.l.b16 %v888
    %v960 = vunpack.c.l.b16 %v889
    %v961 = vunpack.c.l.b16 %v890
    %v962 = vunpack.c.l.b16 %v891
    %v963 = vunpack.c.l.b16 %v892
    %v964 = vunpack.c.l.b16 %v893
    %v965 = vunpack.c.l.b16 %v894
    %v966 = vunpack.c.l.b16 %v895
    %v967 = vunpack.c.l.b16 %v896
    %v968 = vunpack.c.l.b16 %v897
    %v969 = vunpack.c.l.b16 %v898
    %v970 = vunpack.c.l.b16 %v899
    %v971 = vunpack.c.l.b16 %v900
    %v972 = vunpack.c.l.b16 %v901
    %v973 = vunpack.c.l.b16 %v902
    %v974 = vunpack.c.l.b16 %v903
    %v975 = vunpack.c.l.b16 %v904
    %v976 = vunpack.c.l.b16 %v905
    %v977 = vunpack.c.l.b16 %v906
    %v978 = vunpack.c.l.b16 %v907
    %v979 = vunpack.c.l.b16 %v908
    %v980 = vunpack.c.l.b16 %v909
    %v981 = vunpack.c.l.b16 %v910
    %v982 = vunpack.c.l.b16 %v911
    %v983 = vunpack.c.l.b16 %v912
    %v984 = vunpack.c.l.b16 %v913
    %v985 = vunpack.c.l.b16 %v914
    %v986 = vunpack.c.l.b16 %v915
    %v987 = vunpack.c.l.b16 %v916
    %v988 = vunpack.c.l.b16 %v917
    %v989 = vunpack.c.l.b16 %v918
    %v990 = vunpack.c.l.b16 %v919
    %v991 = vpack.c.b16 %v960, %v959
    %v992 = vpack.c.b16 %v962, %v961
    %v993 = vpack.c.b16 %v964, %v963
    %v994 = vpack.c.b16 %v966, %v965
    %v995 = vpack.c.b16 %v968, %v967
    %v996 = vpack.c.b16 %v970, %v969
    %v997 = vpack.c.b16 %v972, %v971
    %v998 = vpack.c.b16 %v974, %v973
    %v999 = vpack.c.b16 %v976, %v975
    %v1000 = vpack.c.b16 %v978, %v977
    %v1001 = vpack.c.b16 %v980, %v979
    %v1002 = vpack.c.b16 %v982, %v981
    %v1003 = vpack.c.b16 %v984, %v983
    %v1004 = vpack.c.b16 %v986, %v985
    %v1005 = vpack.c.b16 %v988, %v987
    %v1006 = vpack.c.b16 %v990, %v989
    %1023 = vmatprep.subr.bf16.mxu0 0
    %1024 = vmatpush1.bf16.msra.mxu0 %v991
    %1025 = vmatprep.subr.bf16.mxu0 0
    %1026 = vmatpush1.bf16.msra.mxu0 %v992
    %1027 = vmatprep.subr.bf16.mxu0 0
    %1028 = vmatpush1.bf16.msra.mxu0 %v993
    %1029 = vmatprep.subr.bf16.mxu0 0
    %1030 = vmatpush1.bf16.msra.mxu0 %v994
    %1031 = vmatprep.subr.bf16.mxu0 0
    %1032 = vmatpush1.bf16.msra.mxu0 %v995
    %1033 = vmatprep.subr.bf16.mxu0 0
    %1034 = vmatpush1.bf16.msra.mxu0 %v996
    %1035 = vmatprep.subr.bf16.mxu0 0
    %1036 = vmatpush1.bf16.msra.mxu0 %v997
    %1037 = vmatprep.subr.bf16.mxu0 0
    %1038 = vmatpush1.bf16.msra.mxu0 %v998
    %1039 = vmatprep.subr.bf16.mxu0 0
    %1040 = vmatpush1.bf16.msra.mxu0 %v999
    %1041 = vmatprep.subr.bf16.mxu0 0
    %1042 = vmatpush1.bf16.msra.mxu0 %v1000
    %1043 = vmatprep.subr.bf16.mxu0 0
    %1044 = vmatpush1.bf16.msra.mxu0 %v1001
    %1045 = vmatprep.subr.bf16.mxu0 0
    %1046 = vmatpush1.bf16.msra.mxu0 %v1002
    %1047 = vmatprep.subr.bf16.mxu0 0
    %1048 = vmatpush1.bf16.msra.mxu0 %v1003
    %1049 = vmatprep.subr.bf16.mxu0 0
    %1050 = vmatpush1.bf16.msra.mxu0 %v1004
    %1051 = vmatprep.subr.bf16.mxu0 0
    %1052 = vmatpush1.bf16.msra.mxu0 %v1005
    %1053 = vmatprep.subr.bf16.mxu0 0
    %1054 = vmatpush1.bf16.msra.mxu0 %v1006
    %1055 = vmatprep.mubr.bf16.mxu0 %v887
    %1056 = vmatmul.mubr.bf16.gmra.mrb[0].mxu0 %v886
    %v1057 = vpop.f32.mrb[0].mxu0
    %v1058 = vadd.f32 %v925, %v1057
    %v1059 = vpop.f32.mrb[0].mxu0
    %v1060 = vpop.f32.mrb[0].mxu0
    %v1061 = vadd.f32 %v925, %v1060
    %v1062 = vpop.f32.mrb[0].mxu0
    %1063 = vdwg.mxu0
    %1064 = vst [vmem:[#allocation8] sm:$0xff] %v1058
    %1065 = vst [vmem:[#allocation8 + $0x8] sm:$0xff] %v1061
    // Predicated region
    $region34: #{tpu_custom_call.1} parent=1 // pred_check
      _
    $region35: #{tpu_custom_call.1} parent=1 // pred_check_branch
      %1067 = sbr.rel (0) target = $region37
    $region36: #{tpu_custom_call.1} parent=1 // pred_region
      %s1069 = ssub.s32 256, 256
      %1070 = vsyncadd [#allocation4], %s1069
      %s1071 = sshll.u32 [#allocation8], 4
      %s1072 = int_to_ptr.vmem [resolvable:$true] %s1071
      %1077 = dma.vmem_to_hbm [thread:$0]  %s1072, 256, %s5, [#allocation4], 128, 128, 8
    $region37: #{tpu_custom_call.1} parent=1 // pred_fallthru
      _
    // Predicated region
    $region38: #{tpu_custom_call.1} parent=1 // pred_check
      _
    $region39: #{tpu_custom_call.1} parent=1 // pred_check_branch
      %1079 = sbr.rel (0) target = $region41
    $region40: #{tpu_custom_call.1} parent=1 // pred_region
      %1080 = dma.done [#allocation4], 256
    $region41: #{tpu_custom_call.1} parent=1 // pred_fallthru
      _
    %1081 = vsyncpa [#allocation3], 1
    %1082 = vsyncpa [#allocation6], 1
    %1083 = vsyncpa [#allocation4], 1

</llo_original>
